<compile_context>
chip_gen: v5e
topology: v5e:2x2
jax: 0.10.0
libtpu: 0.0.40
codegen_flags: <defaults>
</compile_context>

<pallas_src>
import math
from functools import partial

import jax
import jax.numpy as jnp
from jax.experimental import pallas as pl
from jax.experimental.pallas import tpu as pltpu


LANE = 128


# ---------------- fused Pallas kernel ----------------

def fused_simplenet_kernel(*refs):
    """refs = (x_ref, w1_ref, b1_ref, ..., wN_ref, bN_ref, o_ref).

    x_ref: [B, d_in] f32 (unpadded).  Weights: bf16, K unpadded for layer 1, N
    unpadded for the last layer, everything else lane-padded to 128 with zeros.
    Biases: f32 [1, D_out(_padded)], padded lanes zero.  o_ref: [B, d_out] f32.
    """
    x_ref = refs[0]
    o_ref = refs[-1]
    wb_refs = refs[1:-1]

    x = x_ref[...]                                    # f32 activations
    for i in range(0, len(wb_refs), 2):
        w = wb_refs[i][...]                           # bf16 weights
        b = wb_refs[i + 1][...]                       # f32 [1, Dp] broadcasts over batch
        # bf16 x bf16 -> f32 accumulate on the MXU; elementwise path stays f32.
        y = jnp.dot(x.astype(w.dtype), w, preferred_element_type=jnp.float32) + b
        x = jnp.maximum(y, 0.0)                       # ReLU; padded lanes stay exactly 0

    # F.normalize(x, p=2, dim=1): x / max(||x||_2, 1e-12) == x * rsqrt(max(sumsq, 1e-24))
    # Last layer's output dim is unpadded, so the reduction is over real lanes only.
    sumsq = jnp.sum(x * x, axis=1, keepdims=True)
    inv = jax.lax.rsqrt(jnp.maximum(sumsq, 1e-24))
    o_ref[...] = (x * inv).astype(o_ref.dtype)


def fused_simplenet_call(x, padded_params):
    """Single pallas_call over the whole network. No grid, whole-array VMEM specs."""
    B = x.shape[0]
    d_out = padded_params[-1][0].shape[1]

    flat_inputs = [x]
    flops = 0
    bytes_acc = x.size * x.dtype.itemsize
    for w, b in padded_params:
        flat_inputs.extend((w, b))
        flops += 2 * B * w.shape[0] * w.shape[1]
        bytes_acc += w.size * w.dtype.itemsize + b.size * b.dtype.itemsize
    bytes_acc += B * d_out * x.dtype.itemsize

    vmem = pl.BlockSpec(memory_space=pltpu.MemorySpace.VMEM)
    return pl.pallas_call(
        fused_simplenet_kernel,
        out_shape=jax.ShapeDtypeStruct((B, d_out), x.dtype),
        in_specs=[vmem] * len(flat_inputs),
        out_specs=vmem,
        cost_estimate=pl.CostEstimate(
            flops=flops, transcendentals=B, bytes_accessed=bytes_acc),
    )(*flat_inputs)


# ---------------- parameter init / padding ----------------

def init_simplenet_params(key, linear_widths):
    """Matches the PyTorch module: xavier_normal_(gain=1) weights, bias filled with 0.01.
    Weights stored pre-transposed as [D_in, D_out]; biases stored as [1, D_out]."""
    params = []
    for i in range(1, len(linear_widths)):
        fan_in, fan_out = linear_widths[i - 1], linear_widths[i]
        key, sub = jax.random.split(key)
        std = 1.0 * math.sqrt(2.0 / (fan_in + fan_out))
        w = std * jax.random.normal(sub, (fan_in, fan_out), dtype=jnp.float32)
        b = jnp.full((1, fan_out), 0.01, dtype=jnp.float32)
        params.append((w, b))
    return params


def _round_up(d, m=LANE):
    return ((d + m - 1) // m) * m


def pad_params_for_kernel(params, weight_dtype=jnp.bfloat16):
    """Lane-pad weights/biases for the fused kernel and cast weights to bf16.

    - Layer 0 keeps its K (input) dim unpadded so x needs no wrapper-side pad.
    - The last layer keeps its N (output) dim unpadded so no post-call slice is needed.
    - All other dims are zero-padded to a multiple of 128.
    - Padded weight entries AND padded bias lanes are 0 so padded activation lanes
      stay exactly 0 through ReLU (required for the L2 norm to be unaffected).
    """
    padded = []
    n_layers = len(params)
    for i, (w, b) in enumerate(params):
        din, dout = w.shape
        dinp = din if i == 0 else _round_up(din)
        doutp = dout if i == n_layers - 1 else _round_up(dout)
        wp = jnp.zeros((dinp, doutp), weight_dtype).at[:din, :dout].set(
            w.astype(weight_dtype))
        bp = jnp.zeros((1, doutp), jnp.float32).at[:, :dout].set(b)
        padded.append((wp, bp))
    return padded


# ---------------- forward ----------------

@jax.jit
def simplenet_forward(x, padded_params):
    # No wrapper-side pad of x and no post-call slice: both happen "for free"
    # inside the single fused pallas_call.
    return fused_simplenet_call(x, padded_params)


# ---------------- pure-JAX reference (f32, unpadded) ----------------

def simplenet_ref(x, params):
    for (w, b) in params:
        x = jnp.maximum(x @ w + b, 0.0)
    nrm = jnp.sqrt(jnp.sum(x * x, axis=1, keepdims=True))
    return x / jnp.maximum(nrm, 1e-12)


if __name__ == "__main__":
    key = jax.random.PRNGKey(0)
    batch = 8
    linear_widths = [32, 64, 48, 16]   # input_dim=32, output_dim=16

    pkey, xkey = jax.random.split(key)
    params = init_simplenet_params(pkey, linear_widths)
    padded_params = pad_params_for_kernel(params)
    x = jax.random.normal(xkey, (batch, linear_widths[0]), dtype=jnp.float32)

    out = simplenet_forward(x, padded_params)
    out = jax.block_until_ready(out)

    ref = simplenet_ref(x, params)
    assert out.shape == (batch, linear_widths[-1])
    # bf16 weights with f32 accumulation: loosened tolerance vs. the f32 reference.
    assert jnp.allclose(out, ref, atol=2e-2, rtol=2e-2), "mismatch vs reference"

    print("KERNEL_OK")
</pallas_src>

<mosaic_0001>
module attributes {stable_mosaic.version = 11 : i64} {
  func.func @fused_simplenet_kernel(%arg0: memref<8x32xf32, #tpu.memory_space<vmem>>, %arg1: memref<32x128xbf16, #tpu.memory_space<vmem>>, %arg2: memref<1x128xf32, #tpu.memory_space<vmem>>, %arg3: memref<128x128xbf16, #tpu.memory_space<vmem>>, %arg4: memref<1x128xf32, #tpu.memory_space<vmem>>, %arg5: memref<128x16xbf16, #tpu.memory_space<vmem>>, %arg6: memref<1x16xf32, #tpu.memory_space<vmem>>, %arg7: memref<8x16xf32, #tpu.memory_space<vmem>>) attributes {dimension_semantics = [], scalar_prefetch = 0 : i64, scratch_operands = 0 : i64, tpu.core_type = #tpu.core_type<tc>} {
    %c0 = arith.constant 0 : index
    %c0_0 = arith.constant 0 : index
    %0 = vector.load %arg0[%c0, %c0_0] : memref<8x32xf32, #tpu.memory_space<vmem>>, vector<8x32xf32>
    %c0_1 = arith.constant 0 : index
    %c0_2 = arith.constant 0 : index
    %1 = vector.load %arg1[%c0_1, %c0_2] : memref<32x128xbf16, #tpu.memory_space<vmem>>, vector<32x128xbf16>
    %c0_3 = arith.constant 0 : index
    %c0_4 = arith.constant 0 : index
    %2 = vector.load %arg2[%c0_3, %c0_4] : memref<1x128xf32, #tpu.memory_space<vmem>>, vector<1x128xf32>
    %3 = arith.truncf %0 : vector<8x32xf32> to vector<8x32xbf16>
    %cst = arith.constant dense<0.000000e+00> : vector<8x128xf32>
    %4 = tpu.matmul %3, %1, %cst {dimension_numbers = #tpu.dot_dimension_numbers<[1], [0], [0], [1], [0, 0, 1, 1], [], []>} : vector<8x32xbf16>, vector<32x128xbf16>, vector<8x128xf32> -> vector<8x128xf32>
    %5 = vector.broadcast %2 : vector<1x128xf32> to vector<8x128xf32>
    %6 = arith.addf %4, %5 : vector<8x128xf32>
    %cst_5 = arith.constant 0.000000e+00 : f32
    %7 = vector.broadcast %cst_5 : f32 to vector<8x128xf32>
    %8 = arith.maximumf %6, %7 : vector<8x128xf32>
    %c0_6 = arith.constant 0 : index
    %c0_7 = arith.constant 0 : index
    %9 = vector.load %arg3[%c0_6, %c0_7] : memref<128x128xbf16, #tpu.memory_space<vmem>>, vector<128x128xbf16>
    %c0_8 = arith.constant 0 : index
    %c0_9 = arith.constant 0 : index
    %10 = vector.load %arg4[%c0_8, %c0_9] : memref<1x128xf32, #tpu.memory_space<vmem>>, vector<1x128xf32>
    %11 = arith.truncf %8 : vector<8x128xf32> to vector<8x128xbf16>
    %cst_10 = arith.constant dense<0.000000e+00> : vector<8x128xf32>
    %12 = tpu.matmul %11, %9, %cst_10 {dimension_numbers = #tpu.dot_dimension_numbers<[1], [0], [0], [1], [0, 0, 1, 1], [], []>} : vector<8x128xbf16>, vector<128x128xbf16>, vector<8x128xf32> -> vector<8x128xf32>
    %13 = vector.broadcast %10 : vector<1x128xf32> to vector<8x128xf32>
    %14 = arith.addf %12, %13 : vector<8x128xf32>
    %cst_11 = arith.constant 0.000000e+00 : f32
    %15 = vector.broadcast %cst_11 : f32 to vector<8x128xf32>
    %16 = arith.maximumf %14, %15 : vector<8x128xf32>
    %c0_12 = arith.constant 0 : index
    %c0_13 = arith.constant 0 : index
    %17 = vector.load %arg5[%c0_12, %c0_13] : memref<128x16xbf16, #tpu.memory_space<vmem>>, vector<128x16xbf16>
    %c0_14 = arith.constant 0 : index
    %c0_15 = arith.constant 0 : index
    %18 = vector.load %arg6[%c0_14, %c0_15] : memref<1x16xf32, #tpu.memory_space<vmem>>, vector<1x16xf32>
    %19 = arith.truncf %16 : vector<8x128xf32> to vector<8x128xbf16>
    %cst_16 = arith.constant dense<0.000000e+00> : vector<8x16xf32>
    %20 = tpu.matmul %19, %17, %cst_16 {dimension_numbers = #tpu.dot_dimension_numbers<[1], [0], [0], [1], [0, 0, 1, 1], [], []>} : vector<8x128xbf16>, vector<128x16xbf16>, vector<8x16xf32> -> vector<8x16xf32>
    %21 = vector.broadcast %18 : vector<1x16xf32> to vector<8x16xf32>
    %22 = arith.addf %20, %21 : vector<8x16xf32>
    %cst_17 = arith.constant 0.000000e+00 : f32
    %23 = vector.broadcast %cst_17 : f32 to vector<8x16xf32>
    %24 = arith.maximumf %22, %23 : vector<8x16xf32>
    %25 = arith.mulf %24, %24 : vector<8x16xf32>
    %cst_18 = arith.constant dense<0.000000e+00> : vector<8xf32>
    %26 = vector.multi_reduction <add>, %25, %cst_18 [1] : vector<8x16xf32> to vector<8xf32>
    %27 = vector.shape_cast %26 : vector<8xf32> to vector<8x1xf32>
    %cst_19 = arith.constant 1.000000e-24 : f32
    %28 = vector.broadcast %cst_19 : f32 to vector<8x1xf32>
    %29 = arith.maximumf %27, %28 : vector<8x1xf32>
    %30 = math.rsqrt %29 : vector<8x1xf32>
    %31 = vector.broadcast %30 : vector<8x1xf32> to vector<8x16xf32>
    %32 = arith.mulf %24, %31 : vector<8x16xf32>
    %c0_20 = arith.constant 0 : index
    %c0_21 = arith.constant 0 : index
    %33 = vector.load %arg7[%c0_20, %c0_21] : memref<8x16xf32, #tpu.memory_space<vmem>>, vector<8x16xf32>
    tpu.vector_store %arg7[%c0_20, %c0_21], %32 {strides = array<i32>} : memref<8x16xf32, #tpu.memory_space<vmem>>, vector<8x16xf32>,
    return
  }
}

</mosaic_0001>

<llo_original>
// kernel: simplenet_forward.1
$region0: #{simplenet_forward.1}
  #allocation0 [shape = 'u32[]', space=smem, size = 0x4, offset = 0x4, fixed_abs, tag = 'smem constant byte address 0x4 - core index']
  #allocation1 [shape = 'u32[72,128]{1,0:T(1,128)}', space=vmem, size = 0x9000, scoped, tag = 'internal scratch']
  %s0 = inlined_call_operand.vmem [shape: f32[8,32], index: 0, kind: input, shape index: {}]
  %s1 = inlined_call_operand.hbm [shape: bf16[32,128], index: 1, kind: input, shape index: {}]
  %s2 = inlined_call_operand.vmem [shape: f32[1,128], index: 2, kind: input, shape index: {}]
  %s3 = inlined_call_operand.vmem [shape: bf16[128,128], index: 3, kind: input, shape index: {}]
  %s4 = inlined_call_operand.vmem [shape: f32[1,128], index: 4, kind: input, shape index: {}]
  %s5 = inlined_call_operand.vmem [shape: bf16[128,16], index: 5, kind: input, shape index: {}]
  %s6 = inlined_call_operand.vmem [shape: f32[1,16], index: 6, kind: input, shape index: {}]
  %s7 = inlined_call_operand.hbm [shape: f32[8,16], index: 7, kind: output, shape index: {}]
  %s8 = sld [smem:[#allocation0]]
  $region42: #{simplenet_forward.1} parent=0
    _
  %s10 = ssub.s32 1, %s8
  %s11 = scalar_select 0, %s10, %s8
  $region1: #{simplenet_forward.1} parent=0
    #allocation2 [shape = 'u8[8192]{0}', space=vmem, size = 0x2000, scoped, tag = 'input window, operand 1, single buffered']
    #allocation3 [shape = 's32[1]{0}', space=sflag, size = 0x4, scoped, tag = 'scoped memory for simplenet_forward.1']
    #allocation4 [shape = 's32[1]{0}', space=sflag, size = 0x4, scoped, tag = 'scoped memory for simplenet_forward.1']
    #allocation5 [shape = 'u8[4096]{0}', space=vmem, size = 0x1000, scoped, tag = 'output window, operand 0, single buffered']
    %12 = vsyncpa [#allocation3], 0
    %13 = vsyncpa [#allocation4], 0
    // Predicated region
    $region2: #{simplenet_forward.1} parent=1 // pred_check
      _
    $region3: #{simplenet_forward.1} parent=1 // pred_check_branch
      %15 = sbr.rel (0) target = $region5
    $region4: #{simplenet_forward.1} parent=1 // pred_region
      _
    $region5: #{simplenet_forward.1} parent=1 // pred_fallthru
      _
    // Predicated region
    $region6: #{simplenet_forward.1} parent=1 // pred_check
      _
    $region7: #{simplenet_forward.1} parent=1 // pred_check_branch
      %17 = sbr.rel (0) target = $region9
    $region8: #{simplenet_forward.1} parent=1 // pred_region
      %19 = vsyncadd [#allocation3], 0
      %s20 = sshll.u32 %s1, 4
      %s21 = int_to_ptr.hbm [resolvable:$true] %s20
      %s22 = sshll.u32 [#allocation2], 4
      %s23 = int_to_ptr.vmem [resolvable:$true] %s22
      %28 = dma.hbm_to_vmem [thread:$0]  %s21, 256, %s23, [#allocation3], 64, 64, 4
    $region9: #{simplenet_forward.1} parent=1 // pred_fallthru
      _
    // Predicated region
    $region10: #{simplenet_forward.1} parent=1 // pred_check
      _
    $region11: #{simplenet_forward.1} parent=1 // pred_check_branch
      %30 = sbr.rel (0) target = $region13
    $region12: #{simplenet_forward.1} parent=1 // pred_region
      _
    $region13: #{simplenet_forward.1} parent=1 // pred_fallthru
      _
    // Predicated region
    $region14: #{simplenet_forward.1} parent=1 // pred_check
      _
    $region15: #{simplenet_forward.1} parent=1 // pred_check_branch
      %32 = sbr.rel (0) target = $region17
    $region16: #{simplenet_forward.1} parent=1 // pred_region
      _
    $region17: #{simplenet_forward.1} parent=1 // pred_fallthru
      _
    // Predicated region
    $region18: #{simplenet_forward.1} parent=1 // pred_check
      _
    $region19: #{simplenet_forward.1} parent=1 // pred_check_branch
      %34 = sbr.rel (0) target = $region21
    $region20: #{simplenet_forward.1} parent=1 // pred_region
      _
    $region21: #{simplenet_forward.1} parent=1 // pred_fallthru
      _
    // Predicated region
    $region22: #{simplenet_forward.1} parent=1 // pred_check
      _
    $region23: #{simplenet_forward.1} parent=1 // pred_check_branch
      %36 = sbr.rel (0) target = $region25
    $region24: #{simplenet_forward.1} parent=1 // pred_region
      _
    $region25: #{simplenet_forward.1} parent=1 // pred_fallthru
      _
    // Predicated region
    $region26: #{simplenet_forward.1} parent=1 // pred_check
      _
    $region27: #{simplenet_forward.1} parent=1 // pred_check_branch
      %38 = sbr.rel (0) target = $region29
    $region28: #{simplenet_forward.1} parent=1 // pred_region
      _
    $region29: #{simplenet_forward.1} parent=1 // pred_fallthru
      _
    // Predicated region
    $region30: #{simplenet_forward.1} parent=1 // pred_check
      _
    $region31: #{simplenet_forward.1} parent=1 // pred_check_branch
      %40 = sbr.rel (0) target = $region33
    $region32: #{simplenet_forward.1} parent=1 // pred_region
      %42 = dma.done [#allocation3], 256
    $region33: #{simplenet_forward.1} parent=1 // pred_fallthru
      _
    %v44 = vld [vmem:[%s0] sm:$0xff]
    %v45 = vld [vmem:[#allocation2] sm:$0xf]
    %v46 = vld [vmem:[#allocation2 + $0x4] sm:$0xf]
    %v47 = vld [vmem:[#allocation2 + $0x8] sm:$0xf]
    %v48 = vld [vmem:[#allocation2 + $0xc] sm:$0xf]
    %v49 = vld [vmem:[%s2] sm:$0x1]
    %v50 = vpack.c.bf16 %v44, %v44
    %v52 = vperm.slane %v49, 0
    %v58 = vunpack.c.l.b16 %v45
    %v59 = vunpack.c.l.b16 %v46
    %v60 = vunpack.c.l.b16 %v47
    %v61 = vunpack.c.l.b16 %v48
    %v62 = vpack.c.b16 %v59, %v58
    %v63 = vpack.c.b16 %v61, %v60
    %vm66 = vcmask 261120
    %v68 = vsel %vm66, %v50, 0
    %70 = vmatpush.bf16.msra.mxu0 0
    %71 = vmatpush.bf16.msra.mxu0 0
    %72 = vmatpush.bf16.msra.mxu0 0
    %73 = vmatpush.bf16.msra.mxu0 0
    %74 = vmatpush.bf16.msra.mxu0 0
    %75 = vmatpush.bf16.msra.mxu0 0
    %76 = vmatpush.bf16.msra.mxu0 %v63
    %77 = vmatpush.bf16.msra.mxu0 %v62
    %78 = vmatmul.bf16.gmra.mxu0 %v68
    %v79 = vpop.f32.mrf.mxu0
    %v80 = vadd.f32 %v52, %v79
    %v81 = vpop.f32.mrf.mxu0
    %82 = vdwg.mxu0
    %v83 = vmax.f32 %v80, 0.0
    %v84 = vld [vmem:[%s3] sm:$0xf]
    %v85 = vld [vmem:[%s3 + $0x4] sm:$0xf]
    %v86 = vld [vmem:[%s3 + $0x8] sm:$0xf]
    %v87 = vld [vmem:[%s3 + $0xc] sm:$0xf]
    %v88 = vld [vmem:[%s3 + $0x10] sm:$0xf]
    %v89 = vld [vmem:[%s3 + $0x14] sm:$0xf]
    %v90 = vld [vmem:[%s3 + $0x18] sm:$0xf]
    %v91 = vld [vmem:[%s3 + $0x1c] sm:$0xf]
    %v92 = vld [vmem:[%s3 + $0x20] sm:$0xf]
    %v93 = vld [vmem:[%s3 + $0x24] sm:$0xf]
    %v94 = vld [vmem:[%s3 + $0x28] sm:$0xf]
    %v95 = vld [vmem:[%s3 + $0x2c] sm:$0xf]
    %v96 = vld [vmem:[%s3 + $0x30] sm:$0xf]
    %v97 = vld [vmem:[%s3 + $0x34] sm:$0xf]
    %v98 = vld [vmem:[%s3 + $0x38] sm:$0xf]
    %v99 = vld [vmem:[%s3 + $0x3c] sm:$0xf]
    %v100 = vld [vmem:[%s4] sm:$0x1]
    %v101 = vpack.c.bf16 %v83, %v83
    %v103 = vperm.slane %v100, 0
    %v121 = vunpack.c.l.b16 %v84
    %v122 = vunpack.c.l.b16 %v85
    %v123 = vunpack.c.l.b16 %v86
    %v124 = vunpack.c.l.b16 %v87
    %v125 = vunpack.c.l.b16 %v88
    %v126 = vunpack.c.l.b16 %v89
    %v127 = vunpack.c.l.b16 %v90
    %v128 = vunpack.c.l.b16 %v91
    %v129 = vunpack.c.l.b16 %v92
    %v130 = vunpack.c.l.b16 %v93
    %v131 = vunpack.c.l.b16 %v94
    %v132 = vunpack.c.l.b16 %v95
    %v133 = vunpack.c.l.b16 %v96
    %v134 = vunpack.c.l.b16 %v97
    %v135 = vunpack.c.l.b16 %v98
    %v136 = vunpack.c.l.b16 %v99
    %v137 = vpack.c.b16 %v122, %v121
    %v138 = vpack.c.b16 %v124, %v123
    %v139 = vpack.c.b16 %v126, %v125
    %v140 = vpack.c.b16 %v128, %v127
    %v141 = vpack.c.b16 %v130, %v129
    %v142 = vpack.c.b16 %v132, %v131
    %v143 = vpack.c.b16 %v134, %v133
    %v144 = vpack.c.b16 %v136, %v135
    %153 = vmatpush.bf16.msra.mxu0 %v144
    %154 = vmatpush.bf16.msra.mxu0 %v143
    %155 = vmatpush.bf16.msra.mxu0 %v142
    %156 = vmatpush.bf16.msra.mxu0 %v141
    %157 = vmatpush.bf16.msra.mxu0 %v140
    %158 = vmatpush.bf16.msra.mxu0 %v139
    %159 = vmatpush.bf16.msra.mxu0 %v138
    %160 = vmatpush.bf16.msra.mxu0 %v137
    %161 = vmatmul.bf16.gmra.mxu0 %v101
    %v162 = vpop.f32.mrf.mxu0
    %v163 = vadd.f32 %v103, %v162
    %v164 = vpop.f32.mrf.mxu0
    %165 = vdwg.mxu0
    %v166 = vmax.f32 %v163, 0.0
    %v167 = vld [vmem:[%s5] sm:$0xf]
    %v168 = vld [vmem:[%s5 + $0x4] sm:$0xf]
    %v169 = vld [vmem:[%s5 + $0x8] sm:$0xf]
    %v170 = vld [vmem:[%s5 + $0xc] sm:$0xf]
    %v171 = vld [vmem:[%s5 + $0x10] sm:$0xf]
    %v172 = vld [vmem:[%s5 + $0x14] sm:$0xf]
    %v173 = vld [vmem:[%s5 + $0x18] sm:$0xf]
    %v174 = vld [vmem:[%s5 + $0x1c] sm:$0xf]
    %v175 = vld [vmem:[%s5 + $0x20] sm:$0xf]
    %v176 = vld [vmem:[%s5 + $0x24] sm:$0xf]
    %v177 = vld [vmem:[%s5 + $0x28] sm:$0xf]
    %v178 = vld [vmem:[%s5 + $0x2c] sm:$0xf]
    %v179 = vld [vmem:[%s5 + $0x30] sm:$0xf]
    %v180 = vld [vmem:[%s5 + $0x34] sm:$0xf]
    %v181 = vld [vmem:[%s5 + $0x38] sm:$0xf]
    %v182 = vld [vmem:[%s5 + $0x3c] sm:$0xf]
    %v183 = vld [vmem:[%s6] sm:$0x1]
    %v184 = vpack.c.bf16 %v166, %v166
    %v186 = vperm.slane %v183, 0
    %v204 = vunpack.c.l.b16 %v167
    %v205 = vunpack.c.l.b16 %v168
    %v206 = vunpack.c.l.b16 %v169
    %v207 = vunpack.c.l.b16 %v170
    %v208 = vunpack.c.l.b16 %v171
    %v209 = vunpack.c.l.b16 %v172
    %v210 = vunpack.c.l.b16 %v173
    %v211 = vunpack.c.l.b16 %v174
    %v212 = vunpack.c.l.b16 %v175
    %v213 = vunpack.c.l.b16 %v176
    %v214 = vunpack.c.l.b16 %v177
    %v215 = vunpack.c.l.b16 %v178
    %v216 = vunpack.c.l.b16 %v179
    %v217 = vunpack.c.l.b16 %v180
    %v218 = vunpack.c.l.b16 %v181
    %v219 = vunpack.c.l.b16 %v182
    %v220 = vpack.c.b16 %v205, %v204
    %v221 = vpack.c.b16 %v207, %v206
    %v222 = vpack.c.b16 %v209, %v208
    %v223 = vpack.c.b16 %v211, %v210
    %v224 = vpack.c.b16 %v213, %v212
    %v225 = vpack.c.b16 %v215, %v214
    %v226 = vpack.c.b16 %v217, %v216
    %v227 = vpack.c.b16 %v219, %v218
    %236 = vmatpush.bf16.msra.mxu0 %v227
    %237 = vmatpush.bf16.msra.mxu0 %v226
    %238 = vmatpush.bf16.msra.mxu0 %v225
    %239 = vmatpush.bf16.msra.mxu0 %v224
    %240 = vmatpush.bf16.msra.mxu0 %v223
    %241 = vmatpush.bf16.msra.mxu0 %v222
    %242 = vmatpush.bf16.msra.mxu0 %v221
    %243 = vmatpush.bf16.msra.mxu0 %v220
    %244 = vmatmul.bf16.gmra.mxu0 %v184
    %v245 = vpop.f32.mrf.mxu0
    %v246 = vadd.f32 %v186, %v245
    %v247 = vpop.f32.mrf.mxu0
    %248 = vdwg.mxu0
    %v249 = vmax.f32 %v246, 0.0
    %v250 = vmul.f32 %v249, %v249
    %vm251 = vcmask 130048
    %v252 = vsel %vm251, %v250, 0.0
    %253 = vadd.xlane.f32.xlu0 %v252
    %v254 = vpop.xlane.xlu0 %253
    %v255 = vmax.f32 %v254, 1e-24
    %v256 = vrsqrt.pop %v255
    %v257 = vmul.f32 %v256, %v255
    %v258 = vmul.f32 %v257, %v256
    %v259 = vmul.f32 0.5, %v258
    %v260 = vsub.f32 1.5, %v259
    %v261 = vmul.f32 %v256, %v260
    %vm262 = vweird.f32 %v255
    %vm263 = vweird.f32 %v256
    %vm264 = vmor %vm262, %vm263
    %v265 = vsel %vm264, %v256, %v261
    %v266 = vmul.f32 %v249, %v265
    %267 = vst.msk [vmem:[#allocation5] sm:$0xff] %vm251, %v266
    // Predicated region
    $region34: #{simplenet_forward.1} parent=1 // pred_check
      _
    $region35: #{simplenet_forward.1} parent=1 // pred_check_branch
      %269 = sbr.rel (0) target = $region37
    $region36: #{simplenet_forward.1} parent=1 // pred_region
      %271 = vsyncadd [#allocation4], 0
      %s273 = sshll.u32 [#allocation5], 4
      %s274 = int_to_ptr.vmem [resolvable:$true] %s273
      %s275 = sshll.u32 %s7, 4
      %s276 = int_to_ptr.hbm [resolvable:$true] %s275
      %278 = dma.vmem_to_hbm [thread:$0]  %s274, 128, %s276, [#allocation4]
    $region37: #{simplenet_forward.1} parent=1 // pred_fallthru
      _
    // Predicated region
    $region38: #{simplenet_forward.1} parent=1 // pred_check
      _
    $region39: #{simplenet_forward.1} parent=1 // pred_check_branch
      %280 = sbr.rel (0) target = $region41
    $region40: #{simplenet_forward.1} parent=1 // pred_region
      %282 = dma.done [#allocation4], 128
    $region41: #{simplenet_forward.1} parent=1 // pred_fallthru
      _
    %283 = vsyncpa [#allocation3], 1
    %284 = vsyncpa [#allocation4], 1

</llo_original>
